<compile_context>
chip_gen: v5e
topology: v5e:2x2
jax: 0.10.0
libtpu: 0.0.40
codegen_flags: <defaults>
</compile_context>

<pallas_src>
import functools
import math

import jax
import jax.numpy as jnp
from jax import lax
from jax.experimental import pallas as pl
from jax.experimental.pallas import tpu as pltpu


def _l1_compute_dtype():
    """bf16 for the L1 elementwise pass on bf16-native VPUs (v6e/v7x), else f32."""
    try:
        kind = jax.devices()[0].device_kind.lower()
    except Exception:
        return jnp.float32
    if any(tag in kind for tag in ("v6", "v7", "7x")):
        return jnp.bfloat16
    return jnp.float32


def arcb_id_kernel(side_col_ref, side_row_ref, emb_ref, w_ref, out_ref,
                   emb_n_ref, *, alpha, M, m, l1_dtype):
    side_col = side_col_ref[...]                       # (B, 2) f32: [class, id]
    side_row = side_row_ref[...]                       # (2, B) f32
    emb = emb_ref[...]                                 # (B, D) f32
    w = w_ref[...]                                     # (1, D) f32

    B, D = emb.shape
    eps = jnp.float32(1e-12)

    classes_col = side_col[:, 0:1]                     # (B, 1)
    ids_col = side_col[:, 1:2]                         # (B, 1)
    classes_row = side_row[0:1, :]                     # (1, B)
    ids_row = side_row[1:2, :]                         # (1, B)

    # ---------------- ArcFace-style BCE-with-logits term ----------------
    emb_sq = jnp.sum(emb * emb, axis=1, keepdims=True)          # (B, 1)
    w_sq = jnp.sum(w * w)                                       # scalar ||w||^2
    logit = jnp.sum(emb * w, axis=1, keepdims=True)             # (B, 1) VPU matvec

    prod = jnp.maximum(w_sq * emb_sq, eps)                      # (||w||*||e||)^2
    inv_scale = lax.rsqrt(prod)                                 # 1/(||w||*||e||)
    scale = prod * inv_scale                                    # ||w||*||e||
    cos_t = jnp.clip(logit * inv_scale, -1.0, 1.0)              # cos(theta), clamped
    sin_t = jnp.sqrt(jnp.maximum(0.0, 1.0 - cos_t * cos_t))     # sin(theta) >= 0
    cos_m = jnp.float32(math.cos(m))
    sin_m = jnp.float32(math.sin(m))
    cos_tp = cos_t * cos_m - sin_t * sin_m                      # cos(theta + m)
    cos_tm = cos_t * cos_m + sin_t * sin_m                      # cos(theta - m)

    outs = scale * (classes_col * cos_tp + (1.0 - classes_col) * cos_tm)

    # BCEWithLogitsLoss (mean reduction), numerically stable form.  (log(1+e^-|x|)
    # underflow for very large |x| contributes <1e-8 to the forward value.)
    bce = (jnp.maximum(outs, 0.0) - outs * classes_col
           + jnp.log(1.0 + jnp.exp(-jnp.abs(outs))))
    loss = jnp.sum(bce) / jnp.float32(outs.size)

    # -------- pairwise ID-based terms on L2-normalized embeddings --------
    inv_norm = lax.rsqrt(jnp.maximum(emb_sq, eps))              # (B, 1)
    emb_n = emb * inv_norm                                      # (B, D) F.normalize
    emb_n_ref[...] = emb_n                                      # f32 scratch for row slices

    # L2 distance via Gram matrix on the MXU: contract last dims of emb_n with
    # itself (no transposed copy, no (B,B,D) intermediate).  bf16 operands,
    # f32 accumulation.
    emb_nb = emb_n.astype(jnp.bfloat16)
    gram = lax.dot_general(emb_nb, emb_nb,
                           dimension_numbers=(((1,), (1,)), ((), ())),
                           preferred_element_type=jnp.float32)  # (B, B)
    l2 = jnp.sqrt(jnp.maximum(0.0, 2.0 - 2.0 * gram))           # (B, B)

    row_i = lax.broadcasted_iota(jnp.int32, (B, B), 0)
    col_j = lax.broadcasted_iota(jnp.int32, (B, B), 1)
    upper = row_i < col_j                                       # combos i < j
    same_id = ids_col == ids_row                                # (B, B)
    same_cls = classes_col == classes_row                       # (B, B)

    # idx1: same id, different class ; idx2: different id, same class
    mask1 = (upper & same_id & jnp.logical_not(same_cls)).astype(jnp.float32)
    mask2 = (upper & jnp.logical_not(same_id) & same_cls).astype(jnp.float32)
    cnt1 = jnp.sum(mask1)
    cnt2 = jnp.sum(mask2)

    term1 = alpha * jnp.sum(mask1 * l2) / jnp.maximum(cnt1, 1.0)
    loss = loss + jnp.where(cnt1 > 0.0, term1, 0.0)

    # L1 term: loop over output rows; |emb_n - row_i| lane-reduced on the XLU.
    # Per-row column mask (ids != id_i) & (classes == cls_i) is symmetric and
    # excludes the diagonal automatically, so the loop counts each unordered
    # pair twice -> halve at the end.  No (B, B) l1 plane is ever built.
    M_f = jnp.float32(M)
    emb_n_l1 = emb_n.astype(l1_dtype)                           # bulk operand (bf16 on v6e/v7x)

    def body(i, acc):
        row = emb_n_ref[pl.ds(i, 1), :].astype(l1_dtype)        # (1, D)
        diff = jnp.abs(emb_n_l1 - row)                          # (B, D) elementwise
        l1_col = jnp.sum(diff.astype(jnp.float32), axis=1, keepdims=True)  # (B, 1)
        sc = side_col_ref[pl.ds(i, 1), :]                       # (1, 2)
        cls_i = sc[:, 0:1]                                      # (1, 1)
        id_i = sc[:, 1:2]                                       # (1, 1)
        m2_col = ((ids_col != id_i) & (classes_col == cls_i)).astype(jnp.float32)
        return acc + jnp.sum(m2_col * jnp.maximum(0.0, M_f - l1_col))

    sum2_sym = lax.fori_loop(0, B, body, jnp.float32(0.0), unroll=min(8, B))
    term2 = alpha * (0.5 * sum2_sym) / jnp.maximum(cnt2, 1.0)
    loss = loss + jnp.where(cnt2 > 0.0, term2, 0.0)

    out_ref[0, 0] = loss


def arcb_id_loss(outputs, classes, emb, ids, w, *, alpha=1.0, M=0.5, m=0.5):
    """JAX/Pallas equivalent of ArcbId.forward(outputs, classes, emb, ids)."""
    del outputs  # unused by the reference forward pass
    B, D = emb.shape
    emb = emb.astype(jnp.float32)
    w = w.reshape(1, D).astype(jnp.float32)

    classes_f = classes.reshape(B).astype(jnp.float32)
    ids_f = ids.reshape(B).astype(jnp.float32)     # small ints: exact in f32
    side_col = jnp.stack([classes_f, ids_f], axis=1)   # (B, 2)
    side_row = jnp.stack([classes_f, ids_f], axis=0)   # (2, B) (tiny; kept as an
                                                       # input instead of an in-kernel transpose)

    l1_dtype = _l1_compute_dtype()
    kernel = functools.partial(
        arcb_id_kernel, alpha=float(alpha), M=float(M), m=float(m),
        l1_dtype=l1_dtype)

    flops = 2 * B * B * D + 3 * B * B * D + 30 * B * B + 12 * B * D
    transcendentals = B * B + 8 * B
    bytes_accessed = 4 * (B * D + 2 * B + 2 * B + D) + 4

    out = pl.pallas_call(
        kernel,
        grid=(1,),
        in_specs=[
            pl.BlockSpec((B, 2), lambda i: (0, 0)),   # packed [classes, ids] cols
            pl.BlockSpec((2, B), lambda i: (0, 0)),   # packed [classes, ids] rows
            pl.BlockSpec((B, D), lambda i: (0, 0)),   # emb
            pl.BlockSpec((1, D), lambda i: (0, 0)),   # w (net's last parameter)
        ],
        out_specs=pl.BlockSpec(memory_space=pltpu.MemorySpace.SMEM),
        out_shape=jax.ShapeDtypeStruct((1, 1), jnp.float32),
        scratch_shapes=[pltpu.VMEM((B, D), jnp.float32)],   # normalized emb
        compiler_params=pltpu.CompilerParams(
            dimension_semantics=("arbitrary",),
            vmem_limit_bytes=32 * 1024 * 1024),
        cost_estimate=pl.CostEstimate(
            flops=flops,
            transcendentals=transcendentals,
            bytes_accessed=bytes_accessed),
    )(side_col, side_row, emb, w)
    return out[0, 0]


if __name__ == "__main__":
    key = jax.random.PRNGKey(0)
    k1, k2, k3, k4, k5 = jax.random.split(key, 5)

    B, D = 8, 32
    emb = jax.random.normal(k1, (B, D), dtype=jnp.float32)
    classes = (jax.random.uniform(k2, (B, 1)) > 0.5).astype(jnp.float32)
    ids = jax.random.randint(k3, (B,), 0, 4, dtype=jnp.int32)
    outputs = jax.random.normal(k4, (B, 1), dtype=jnp.float32)  # unused by forward
    # Deterministic stand-in for list(net.parameters())[-1]: final Linear(D, 1).
    w = 0.1 * jax.random.normal(k5, (1, D), dtype=jnp.float32)

    loss = arcb_id_loss(outputs, classes, emb, ids, w, alpha=1.0, M=0.5, m=0.5)
    jax.block_until_ready(loss)
    print("KERNEL_OK")
</pallas_src>

<mosaic_0001>
module attributes {stable_mosaic.version = 11 : i64} {
  func.func @arcb_id_kernel(%arg0: i32, %arg1: memref<8x2xf32, #tpu.memory_space<vmem>>, %arg2: memref<2x8xf32, #tpu.memory_space<vmem>>, %arg3: memref<8x32xf32, #tpu.memory_space<vmem>>, %arg4: memref<1x32xf32, #tpu.memory_space<vmem>>, %arg5: memref<1x1xf32, #tpu.memory_space<smem>>, %arg6: memref<8x32xf32, #tpu.memory_space<vmem>>) attributes {dimension_semantics = [#tpu.dimension_semantics<arbitrary>], iteration_bounds = array<i64: 1>, scalar_prefetch = 0 : i64, scratch_operands = 1 : i64, tpu.core_type = #tpu.core_type<tc>, window_params = [{pipeline_mode = #tpu.pipeline_mode<synchronous>, transform_indices = @transform_0, window_bounds = array<i64: 8, 2>}, {pipeline_mode = #tpu.pipeline_mode<synchronous>, transform_indices = @transform_1, window_bounds = array<i64: 2, 8>}, {pipeline_mode = #tpu.pipeline_mode<synchronous>, transform_indices = @transform_2, window_bounds = array<i64: 8, 32>}, {pipeline_mode = #tpu.pipeline_mode<synchronous>, transform_indices = @transform_3, window_bounds = array<i64: 1, 32>}, {transform_indices = @transform_4, window_bounds = array<i64: 1, 1>}]} {
    %c0 = arith.constant 0 : index
    %c0_0 = arith.constant 0 : index
    %0 = vector.load %arg1[%c0, %c0_0] : memref<8x2xf32, #tpu.memory_space<vmem>>, vector<8x2xf32>
    %c0_1 = arith.constant 0 : index
    %c0_2 = arith.constant 0 : index
    %1 = vector.load %arg2[%c0_1, %c0_2] : memref<2x8xf32, #tpu.memory_space<vmem>>, vector<2x8xf32>
    %c0_3 = arith.constant 0 : index
    %c0_4 = arith.constant 0 : index
    %2 = vector.load %arg3[%c0_3, %c0_4] : memref<8x32xf32, #tpu.memory_space<vmem>>, vector<8x32xf32>
    %c0_5 = arith.constant 0 : index
    %c0_6 = arith.constant 0 : index
    %3 = vector.load %arg4[%c0_5, %c0_6] : memref<1x32xf32, #tpu.memory_space<vmem>>, vector<1x32xf32>
    %4 = vector.extract_strided_slice %0 {offsets = [0, 0], sizes = [8, 1], strides = [1, 1]} : vector<8x2xf32> to vector<8x1xf32>
    %5 = vector.extract_strided_slice %0 {offsets = [0, 1], sizes = [8, 1], strides = [1, 1]} : vector<8x2xf32> to vector<8x1xf32>
    %6 = vector.extract_strided_slice %1 {offsets = [0, 0], sizes = [1, 8], strides = [1, 1]} : vector<2x8xf32> to vector<1x8xf32>
    %7 = vector.extract_strided_slice %1 {offsets = [1, 0], sizes = [1, 8], strides = [1, 1]} : vector<2x8xf32> to vector<1x8xf32>
    %8 = arith.mulf %2, %2 : vector<8x32xf32>
    %cst = arith.constant dense<0.000000e+00> : vector<8xf32>
    %9 = vector.multi_reduction <add>, %8, %cst [1] : vector<8x32xf32> to vector<8xf32>
    %10 = vector.shape_cast %9 : vector<8xf32> to vector<8x1xf32>
    %11 = arith.mulf %3, %3 : vector<1x32xf32>
    %12 = vector.shape_cast %11 : vector<1x32xf32> to vector<1x1x32xf32>
    %cst_7 = arith.constant dense<0.000000e+00> : vector<1xf32>
    %13 = vector.multi_reduction <add>, %12, %cst_7 [1, 2] : vector<1x1x32xf32> to vector<1xf32>
    %14 = vector.shape_cast %13 : vector<1xf32> to vector<1x1x1xf32>
    %15 = vector.extract %14[0, 0, 0] : f32 from vector<1x1x1xf32>
    %16 = vector.broadcast %3 : vector<1x32xf32> to vector<8x32xf32>
    %17 = arith.mulf %2, %16 : vector<8x32xf32>
    %cst_8 = arith.constant dense<0.000000e+00> : vector<8xf32>
    %18 = vector.multi_reduction <add>, %17, %cst_8 [1] : vector<8x32xf32> to vector<8xf32>
    %19 = vector.shape_cast %18 : vector<8xf32> to vector<8x1xf32>
    %20 = vector.broadcast %15 : f32 to vector<8x1xf32>
    %21 = arith.mulf %20, %10 : vector<8x1xf32>
    %cst_9 = arith.constant 9.99999996E-13 : f32
    %22 = vector.broadcast %cst_9 : f32 to vector<8x1xf32>
    %23 = arith.maximumf %21, %22 : vector<8x1xf32>
    %24 = math.rsqrt %23 : vector<8x1xf32>
    %25 = arith.mulf %23, %24 : vector<8x1xf32>
    %26 = arith.mulf %19, %24 : vector<8x1xf32>
    %cst_10 = arith.constant -1.000000e+00 : f32
    %cst_11 = arith.constant 1.000000e+00 : f32
    %27 = vector.broadcast %cst_10 : f32 to vector<8x1xf32>
    %28 = arith.maximumf %27, %26 : vector<8x1xf32>
    %29 = vector.broadcast %cst_11 : f32 to vector<8x1xf32>
    %30 = arith.minimumf %29, %28 : vector<8x1xf32>
    %31 = arith.mulf %30, %30 : vector<8x1xf32>
    %cst_12 = arith.constant 1.000000e+00 : f32
    %32 = vector.broadcast %cst_12 : f32 to vector<8x1xf32>
    %33 = arith.subf %32, %31 : vector<8x1xf32>
    %cst_13 = arith.constant 0.000000e+00 : f32
    %34 = vector.broadcast %cst_13 : f32 to vector<8x1xf32>
    %35 = arith.maximumf %34, %33 : vector<8x1xf32>
    %36 = math.sqrt %35 : vector<8x1xf32>
    %cst_14 = arith.constant 0.87758255 : f32
    %37 = vector.broadcast %cst_14 : f32 to vector<8x1xf32>
    %38 = arith.mulf %30, %37 : vector<8x1xf32>
    %cst_15 = arith.constant 0.47942555 : f32
    %39 = vector.broadcast %cst_15 : f32 to vector<8x1xf32>
    %40 = arith.mulf %36, %39 : vector<8x1xf32>
    %41 = arith.subf %38, %40 : vector<8x1xf32>
    %cst_16 = arith.constant 0.87758255 : f32
    %42 = vector.broadcast %cst_16 : f32 to vector<8x1xf32>
    %43 = arith.mulf %30, %42 : vector<8x1xf32>
    %cst_17 = arith.constant 0.47942555 : f32
    %44 = vector.broadcast %cst_17 : f32 to vector<8x1xf32>
    %45 = arith.mulf %36, %44 : vector<8x1xf32>
    %46 = arith.addf %43, %45 : vector<8x1xf32>
    %47 = arith.mulf %4, %41 : vector<8x1xf32>
    %cst_18 = arith.constant 1.000000e+00 : f32
    %48 = vector.broadcast %cst_18 : f32 to vector<8x1xf32>
    %49 = arith.subf %48, %4 : vector<8x1xf32>
    %50 = arith.mulf %49, %46 : vector<8x1xf32>
    %51 = arith.addf %47, %50 : vector<8x1xf32>
    %52 = arith.mulf %25, %51 : vector<8x1xf32>
    %cst_19 = arith.constant 0.000000e+00 : f32
    %53 = vector.broadcast %cst_19 : f32 to vector<8x1xf32>
    %54 = arith.maximumf %52, %53 : vector<8x1xf32>
    %55 = arith.mulf %52, %4 : vector<8x1xf32>
    %56 = arith.subf %54, %55 : vector<8x1xf32>
    %57 = math.absf %52 : vector<8x1xf32>
    %cst_20 = arith.constant 0.000000e+00 : f32
    %58 = vector.broadcast %cst_20 : f32 to vector<8x1xf32>
    %59 = arith.subf %58, %57 : vector<8x1xf32>
    %60 = math.exp %59 : vector<8x1xf32>
    %cst_21 = arith.constant 1.000000e+00 : f32
    %61 = vector.broadcast %cst_21 : f32 to vector<8x1xf32>
    %62 = arith.addf %61, %60 : vector<8x1xf32>
    %63 = math.log %62 : vector<8x1xf32>
    %64 = arith.addf %56, %63 : vector<8x1xf32>
    %65 = vector.shape_cast %64 : vector<8x1xf32> to vector<1x8x1xf32>
    %cst_22 = arith.constant dense<0.000000e+00> : vector<1xf32>
    %66 = vector.multi_reduction <add>, %65, %cst_22 [1, 2] : vector<1x8x1xf32> to vector<1xf32>
    %67 = vector.shape_cast %66 : vector<1xf32> to vector<1x1x1xf32>
    %68 = vector.extract %67[0, 0, 0] : f32 from vector<1x1x1xf32>
    %cst_23 = arith.constant 8.000000e+00 : f32
    %69 = arith.divf %68, %cst_23 : f32
    %cst_24 = arith.constant 9.99999996E-13 : f32
    %70 = vector.broadcast %cst_24 : f32 to vector<8x1xf32>
    %71 = arith.maximumf %10, %70 : vector<8x1xf32>
    %72 = math.rsqrt %71 : vector<8x1xf32>
    %73 = vector.broadcast %72 : vector<8x1xf32> to vector<8x32xf32>
    %74 = arith.mulf %2, %73 : vector<8x32xf32>
    %c0_25 = arith.constant 0 : index
    %c0_26 = arith.constant 0 : index
    %75 = vector.load %arg6[%c0_25, %c0_26] : memref<8x32xf32, #tpu.memory_space<vmem>>, vector<8x32xf32>
    tpu.vector_store %arg6[%c0_25, %c0_26], %74 {strides = array<i32>} : memref<8x32xf32, #tpu.memory_space<vmem>>, vector<8x32xf32>,
    %76 = arith.truncf %74 : vector<8x32xf32> to vector<8x32xbf16>
    %cst_27 = arith.constant dense<0.000000e+00> : vector<8x8xf32>
    %77 = tpu.matmul %76, %76, %cst_27 {dimension_numbers = #tpu.dot_dimension_numbers<[1], [1], [0], [0], [0, 0, 1, 0], [], []>} : vector<8x32xbf16>, vector<8x32xbf16>, vector<8x8xf32> -> vector<8x8xf32>
    %cst_28 = arith.constant 2.000000e+00 : f32
    %78 = vector.broadcast %cst_28 : f32 to vector<8x8xf32>
    %79 = arith.mulf %78, %77 : vector<8x8xf32>
    %cst_29 = arith.constant 2.000000e+00 : f32
    %80 = vector.broadcast %cst_29 : f32 to vector<8x8xf32>
    %81 = arith.subf %80, %79 : vector<8x8xf32>
    %cst_30 = arith.constant 0.000000e+00 : f32
    %82 = vector.broadcast %cst_30 : f32 to vector<8x8xf32>
    %83 = arith.maximumf %82, %81 : vector<8x8xf32>
    %84 = math.sqrt %83 : vector<8x8xf32>
    %85 = tpu.iota {dimensions = array<i32: 0>} : vector<8x8xi32>
    %86 = tpu.iota {dimensions = array<i32: 1>} : vector<8x8xi32>
    %87 = arith.cmpi slt, %85, %86 : vector<8x8xi32>
    %88 = vector.broadcast %5 : vector<8x1xf32> to vector<8x8xf32>
    %89 = vector.broadcast %7 : vector<1x8xf32> to vector<8x8xf32>
    %90 = arith.cmpf oeq, %88, %89 : vector<8x8xf32>
    %91 = vector.broadcast %4 : vector<8x1xf32> to vector<8x8xf32>
    %92 = vector.broadcast %6 : vector<1x8xf32> to vector<8x8xf32>
    %93 = arith.cmpf oeq, %91, %92 : vector<8x8xf32>
    %94 = arith.andi %87, %90 : vector<8x8xi1>
    %cst_31 = arith.constant dense<true> : vector<8x8xi1>
    %95 = arith.xori %93, %cst_31 : vector<8x8xi1>
    %96 = arith.andi %94, %95 : vector<8x8xi1>
    %97 = arith.extui %96 : vector<8x8xi1> to vector<8x8xi32>
    %98 = arith.sitofp %97 : vector<8x8xi32> to vector<8x8xf32>
    %cst_32 = arith.constant dense<true> : vector<8x8xi1>
    %99 = arith.xori %90, %cst_32 : vector<8x8xi1>
    %100 = arith.andi %87, %99 : vector<8x8xi1>
    %101 = arith.andi %100, %93 : vector<8x8xi1>
    %102 = arith.extui %101 : vector<8x8xi1> to vector<8x8xi32>
    %103 = arith.sitofp %102 : vector<8x8xi32> to vector<8x8xf32>
    %104 = vector.shape_cast %98 : vector<8x8xf32> to vector<1x8x8xf32>
    %cst_33 = arith.constant dense<0.000000e+00> : vector<1xf32>
    %105 = vector.multi_reduction <add>, %104, %cst_33 [1, 2] : vector<1x8x8xf32> to vector<1xf32>
    %106 = vector.shape_cast %105 : vector<1xf32> to vector<1x1x1xf32>
    %107 = vector.extract %106[0, 0, 0] : f32 from vector<1x1x1xf32>
    %108 = vector.shape_cast %103 : vector<8x8xf32> to vector<1x8x8xf32>
    %cst_34 = arith.constant dense<0.000000e+00> : vector<1xf32>
    %109 = vector.multi_reduction <add>, %108, %cst_34 [1, 2] : vector<1x8x8xf32> to vector<1xf32>
    %110 = vector.shape_cast %109 : vector<1xf32> to vector<1x1x1xf32>
    %111 = vector.extract %110[0, 0, 0] : f32 from vector<1x1x1xf32>
    %112 = arith.mulf %98, %84 : vector<8x8xf32>
    %113 = vector.shape_cast %112 : vector<8x8xf32> to vector<1x8x8xf32>
    %cst_35 = arith.constant dense<0.000000e+00> : vector<1xf32>
    %114 = vector.multi_reduction <add>, %113, %cst_35 [1, 2] : vector<1x8x8xf32> to vector<1xf32>
    %115 = vector.shape_cast %114 : vector<1xf32> to vector<1x1x1xf32>
    %116 = vector.extract %115[0, 0, 0] : f32 from vector<1x1x1xf32>
    %cst_36 = arith.constant 1.000000e+00 : f32
    %117 = arith.mulf %cst_36, %116 : f32
    %cst_37 = arith.constant 1.000000e+00 : f32
    %118 = arith.maximumf %107, %cst_37 : f32
    %119 = arith.divf %117, %118 : f32
    %cst_38 = arith.constant 0.000000e+00 : f32
    %120 = arith.cmpf ogt, %107, %cst_38 : f32
    %cst_39 = arith.constant 0.000000e+00 : f32
    %121 = arith.select %120, %119, %cst_39 : f32
    %122 = arith.addf %69, %121 : f32
    %cst_40 = arith.constant 5.000000e-01 : f32
    %cst_41 = arith.constant 0.000000e+00 : f32
    %c0_i32 = arith.constant 0 : i32
    %123 = arith.index_cast %c0_i32 : i32 to index
    %c0_42 = arith.constant 0 : index
    %124 = vector.load %arg6[%123, %c0_42] : memref<8x32xf32, #tpu.memory_space<vmem>>, vector<1x32xf32>
    %125 = vector.broadcast %124 : vector<1x32xf32> to vector<8x32xf32>
    %126 = arith.subf %74, %125 : vector<8x32xf32>
    %127 = math.absf %126 : vector<8x32xf32>
    %cst_43 = arith.constant dense<0.000000e+00> : vector<8xf32>
    %128 = vector.multi_reduction <add>, %127, %cst_43 [1] : vector<8x32xf32> to vector<8xf32>
    %129 = vector.shape_cast %128 : vector<8xf32> to vector<8x1xf32>
    %130 = arith.index_cast %c0_i32 : i32 to index
    %c0_44 = arith.constant 0 : index
    %131 = vector.load %arg1[%130, %c0_44] : memref<8x2xf32, #tpu.memory_space<vmem>>, vector<1x2xf32>
    %132 = vector.extract_strided_slice %131 {offsets = [0, 0], sizes = [1, 1], strides = [1, 1]} : vector<1x2xf32> to vector<1x1xf32>
    %133 = vector.extract_strided_slice %131 {offsets = [0, 1], sizes = [1, 1], strides = [1, 1]} : vector<1x2xf32> to vector<1x1xf32>
    %134 = vector.broadcast %133 : vector<1x1xf32> to vector<8x1xf32>
    %135 = arith.cmpf one, %5, %134 : vector<8x1xf32>
    %136 = vector.broadcast %132 : vector<1x1xf32> to vector<8x1xf32>
    %137 = arith.cmpf oeq, %4, %136 : vector<8x1xf32>
    %138 = arith.andi %135, %137 : vector<8x1xi1>
    %139 = arith.extui %138 : vector<8x1xi1> to vector<8x1xi32>
    %140 = arith.sitofp %139 : vector<8x1xi32> to vector<8x1xf32>
    %141 = vector.broadcast %cst_40 : f32 to vector<8x1xf32>
    %142 = arith.subf %141, %129 : vector<8x1xf32>
    %cst_45 = arith.constant 0.000000e+00 : f32
    %143 = vector.broadcast %cst_45 : f32 to vector<8x1xf32>
    %144 = arith.maximumf %143, %142 : vector<8x1xf32>
    %145 = arith.mulf %140, %144 : vector<8x1xf32>
    %146 = vector.shape_cast %145 : vector<8x1xf32> to vector<1x8x1xf32>
    %cst_46 = arith.constant dense<0.000000e+00> : vector<1xf32>
    %147 = vector.multi_reduction <add>, %146, %cst_46 [1, 2] : vector<1x8x1xf32> to vector<1xf32>
    %148 = vector.shape_cast %147 : vector<1xf32> to vector<1x1x1xf32>
    %149 = vector.extract %148[0, 0, 0] : f32 from vector<1x1x1xf32>
    %150 = arith.addf %cst_41, %149 : f32
    %c1_i32 = arith.constant 1 : i32
    %151 = arith.index_cast %c1_i32 : i32 to index
    %c0_47 = arith.constant 0 : index
    %152 = vector.load %arg6[%151, %c0_47] : memref<8x32xf32, #tpu.memory_space<vmem>>, vector<1x32xf32>
    %153 = vector.broadcast %152 : vector<1x32xf32> to vector<8x32xf32>
    %154 = arith.subf %74, %153 : vector<8x32xf32>
    %155 = math.absf %154 : vector<8x32xf32>
    %cst_48 = arith.constant dense<0.000000e+00> : vector<8xf32>
    %156 = vector.multi_reduction <add>, %155, %cst_48 [1] : vector<8x32xf32> to vector<8xf32>
    %157 = vector.shape_cast %156 : vector<8xf32> to vector<8x1xf32>
    %158 = arith.index_cast %c1_i32 : i32 to index
    %c0_49 = arith.constant 0 : index
    %159 = vector.load %arg1[%158, %c0_49] : memref<8x2xf32, #tpu.memory_space<vmem>>, vector<1x2xf32>
    %160 = vector.extract_strided_slice %159 {offsets = [0, 0], sizes = [1, 1], strides = [1, 1]} : vector<1x2xf32> to vector<1x1xf32>
    %161 = vector.extract_strided_slice %159 {offsets = [0, 1], sizes = [1, 1], strides = [1, 1]} : vector<1x2xf32> to vector<1x1xf32>
    %162 = vector.broadcast %161 : vector<1x1xf32> to vector<8x1xf32>
    %163 = arith.cmpf one, %5, %162 : vector<8x1xf32>
    %164 = vector.broadcast %160 : vector<1x1xf32> to vector<8x1xf32>
    %165 = arith.cmpf oeq, %4, %164 : vector<8x1xf32>
    %166 = arith.andi %163, %165 : vector<8x1xi1>
    %167 = arith.extui %166 : vector<8x1xi1> to vector<8x1xi32>
    %168 = arith.sitofp %167 : vector<8x1xi32> to vector<8x1xf32>
    %169 = vector.broadcast %cst_40 : f32 to vector<8x1xf32>
    %170 = arith.subf %169, %157 : vector<8x1xf32>
    %cst_50 = arith.constant 0.000000e+00 : f32
    %171 = vector.broadcast %cst_50 : f32 to vector<8x1xf32>
    %172 = arith.maximumf %171, %170 : vector<8x1xf32>
    %173 = arith.mulf %168, %172 : vector<8x1xf32>
    %174 = vector.shape_cast %173 : vector<8x1xf32> to vector<1x8x1xf32>
    %cst_51 = arith.constant dense<0.000000e+00> : vector<1xf32>
    %175 = vector.multi_reduction <add>, %174, %cst_51 [1, 2] : vector<1x8x1xf32> to vector<1xf32>
    %176 = vector.shape_cast %175 : vector<1xf32> to vector<1x1x1xf32>
    %177 = vector.extract %176[0, 0, 0] : f32 from vector<1x1x1xf32>
    %178 = arith.addf %150, %177 : f32
    %c2_i32 = arith.constant 2 : i32
    %179 = arith.index_cast %c2_i32 : i32 to index
    %c0_52 = arith.constant 0 : index
    %180 = vector.load %arg6[%179, %c0_52] : memref<8x32xf32, #tpu.memory_space<vmem>>, vector<1x32xf32>
    %181 = vector.broadcast %180 : vector<1x32xf32> to vector<8x32xf32>
    %182 = arith.subf %74, %181 : vector<8x32xf32>
    %183 = math.absf %182 : vector<8x32xf32>
    %cst_53 = arith.constant dense<0.000000e+00> : vector<8xf32>
    %184 = vector.multi_reduction <add>, %183, %cst_53 [1] : vector<8x32xf32> to vector<8xf32>
    %185 = vector.shape_cast %184 : vector<8xf32> to vector<8x1xf32>
    %186 = arith.index_cast %c2_i32 : i32 to index
    %c0_54 = arith.constant 0 : index
    %187 = vector.load %arg1[%186, %c0_54] : memref<8x2xf32, #tpu.memory_space<vmem>>, vector<1x2xf32>
    %188 = vector.extract_strided_slice %187 {offsets = [0, 0], sizes = [1, 1], strides = [1, 1]} : vector<1x2xf32> to vector<1x1xf32>
    %189 = vector.extract_strided_slice %187 {offsets = [0, 1], sizes = [1, 1], strides = [1, 1]} : vector<1x2xf32> to vector<1x1xf32>
    %190 = vector.broadcast %189 : vector<1x1xf32> to vector<8x1xf32>
    %191 = arith.cmpf one, %5, %190 : vector<8x1xf32>
    %192 = vector.broadcast %188 : vector<1x1xf32> to vector<8x1xf32>
    %193 = arith.cmpf oeq, %4, %192 : vector<8x1xf32>
    %194 = arith.andi %191, %193 : vector<8x1xi1>
    %195 = arith.extui %194 : vector<8x1xi1> to vector<8x1xi32>
    %196 = arith.sitofp %195 : vector<8x1xi32> to vector<8x1xf32>
    %197 = vector.broadcast %cst_40 : f32 to vector<8x1xf32>
    %198 = arith.subf %197, %185 : vector<8x1xf32>
    %cst_55 = arith.constant 0.000000e+00 : f32
    %199 = vector.broadcast %cst_55 : f32 to vector<8x1xf32>
    %200 = arith.maximumf %199, %198 : vector<8x1xf32>
    %201 = arith.mulf %196, %200 : vector<8x1xf32>
    %202 = vector.shape_cast %201 : vector<8x1xf32> to vector<1x8x1xf32>
    %cst_56 = arith.constant dense<0.000000e+00> : vector<1xf32>
    %203 = vector.multi_reduction <add>, %202, %cst_56 [1, 2] : vector<1x8x1xf32> to vector<1xf32>
    %204 = vector.shape_cast %203 : vector<1xf32> to vector<1x1x1xf32>
    %205 = vector.extract %204[0, 0, 0] : f32 from vector<1x1x1xf32>
    %206 = arith.addf %178, %205 : f32
    %c3_i32 = arith.constant 3 : i32
    %207 = arith.index_cast %c3_i32 : i32 to index
    %c0_57 = arith.constant 0 : index
    %208 = vector.load %arg6[%207, %c0_57] : memref<8x32xf32, #tpu.memory_space<vmem>>, vector<1x32xf32>
    %209 = vector.broadcast %208 : vector<1x32xf32> to vector<8x32xf32>
    %210 = arith.subf %74, %209 : vector<8x32xf32>
    %211 = math.absf %210 : vector<8x32xf32>
    %cst_58 = arith.constant dense<0.000000e+00> : vector<8xf32>
    %212 = vector.multi_reduction <add>, %211, %cst_58 [1] : vector<8x32xf32> to vector<8xf32>
    %213 = vector.shape_cast %212 : vector<8xf32> to vector<8x1xf32>
    %214 = arith.index_cast %c3_i32 : i32 to index
    %c0_59 = arith.constant 0 : index
    %215 = vector.load %arg1[%214, %c0_59] : memref<8x2xf32, #tpu.memory_space<vmem>>, vector<1x2xf32>
    %216 = vector.extract_strided_slice %215 {offsets = [0, 0], sizes = [1, 1], strides = [1, 1]} : vector<1x2xf32> to vector<1x1xf32>
    %217 = vector.extract_strided_slice %215 {offsets = [0, 1], sizes = [1, 1], strides = [1, 1]} : vector<1x2xf32> to vector<1x1xf32>
    %218 = vector.broadcast %217 : vector<1x1xf32> to vector<8x1xf32>
    %219 = arith.cmpf one, %5, %218 : vector<8x1xf32>
    %220 = vector.broadcast %216 : vector<1x1xf32> to vector<8x1xf32>
    %221 = arith.cmpf oeq, %4, %220 : vector<8x1xf32>
    %222 = arith.andi %219, %221 : vector<8x1xi1>
    %223 = arith.extui %222 : vector<8x1xi1> to vector<8x1xi32>
    %224 = arith.sitofp %223 : vector<8x1xi32> to vector<8x1xf32>
    %225 = vector.broadcast %cst_40 : f32 to vector<8x1xf32>
    %226 = arith.subf %225, %213 : vector<8x1xf32>
    %cst_60 = arith.constant 0.000000e+00 : f32
    %227 = vector.broadcast %cst_60 : f32 to vector<8x1xf32>
    %228 = arith.maximumf %227, %226 : vector<8x1xf32>
    %229 = arith.mulf %224, %228 : vector<8x1xf32>
    %230 = vector.shape_cast %229 : vector<8x1xf32> to vector<1x8x1xf32>
    %cst_61 = arith.constant dense<0.000000e+00> : vector<1xf32>
    %231 = vector.multi_reduction <add>, %230, %cst_61 [1, 2] : vector<1x8x1xf32> to vector<1xf32>
    %232 = vector.shape_cast %231 : vector<1xf32> to vector<1x1x1xf32>
    %233 = vector.extract %232[0, 0, 0] : f32 from vector<1x1x1xf32>
    %234 = arith.addf %206, %233 : f32
    %c4_i32 = arith.constant 4 : i32
    %235 = arith.index_cast %c4_i32 : i32 to index
    %c0_62 = arith.constant 0 : index
    %236 = vector.load %arg6[%235, %c0_62] : memref<8x32xf32, #tpu.memory_space<vmem>>, vector<1x32xf32>
    %237 = vector.broadcast %236 : vector<1x32xf32> to vector<8x32xf32>
    %238 = arith.subf %74, %237 : vector<8x32xf32>
    %239 = math.absf %238 : vector<8x32xf32>
    %cst_63 = arith.constant dense<0.000000e+00> : vector<8xf32>
    %240 = vector.multi_reduction <add>, %239, %cst_63 [1] : vector<8x32xf32> to vector<8xf32>
    %241 = vector.shape_cast %240 : vector<8xf32> to vector<8x1xf32>
    %242 = arith.index_cast %c4_i32 : i32 to index
    %c0_64 = arith.constant 0 : index
    %243 = vector.load %arg1[%242, %c0_64] : memref<8x2xf32, #tpu.memory_space<vmem>>, vector<1x2xf32>
    %244 = vector.extract_strided_slice %243 {offsets = [0, 0], sizes = [1, 1], strides = [1, 1]} : vector<1x2xf32> to vector<1x1xf32>
    %245 = vector.extract_strided_slice %243 {offsets = [0, 1], sizes = [1, 1], strides = [1, 1]} : vector<1x2xf32> to vector<1x1xf32>
    %246 = vector.broadcast %245 : vector<1x1xf32> to vector<8x1xf32>
    %247 = arith.cmpf one, %5, %246 : vector<8x1xf32>
    %248 = vector.broadcast %244 : vector<1x1xf32> to vector<8x1xf32>
    %249 = arith.cmpf oeq, %4, %248 : vector<8x1xf32>
    %250 = arith.andi %247, %249 : vector<8x1xi1>
    %251 = arith.extui %250 : vector<8x1xi1> to vector<8x1xi32>
    %252 = arith.sitofp %251 : vector<8x1xi32> to vector<8x1xf32>
    %253 = vector.broadcast %cst_40 : f32 to vector<8x1xf32>
    %254 = arith.subf %253, %241 : vector<8x1xf32>
    %cst_65 = arith.constant 0.000000e+00 : f32
    %255 = vector.broadcast %cst_65 : f32 to vector<8x1xf32>
    %256 = arith.maximumf %255, %254 : vector<8x1xf32>
    %257 = arith.mulf %252, %256 : vector<8x1xf32>
    %258 = vector.shape_cast %257 : vector<8x1xf32> to vector<1x8x1xf32>
    %cst_66 = arith.constant dense<0.000000e+00> : vector<1xf32>
    %259 = vector.multi_reduction <add>, %258, %cst_66 [1, 2] : vector<1x8x1xf32> to vector<1xf32>
    %260 = vector.shape_cast %259 : vector<1xf32> to vector<1x1x1xf32>
    %261 = vector.extract %260[0, 0, 0] : f32 from vector<1x1x1xf32>
    %262 = arith.addf %234, %261 : f32
    %c5_i32 = arith.constant 5 : i32
    %263 = arith.index_cast %c5_i32 : i32 to index
    %c0_67 = arith.constant 0 : index
    %264 = vector.load %arg6[%263, %c0_67] : memref<8x32xf32, #tpu.memory_space<vmem>>, vector<1x32xf32>
    %265 = vector.broadcast %264 : vector<1x32xf32> to vector<8x32xf32>
    %266 = arith.subf %74, %265 : vector<8x32xf32>
    %267 = math.absf %266 : vector<8x32xf32>
    %cst_68 = arith.constant dense<0.000000e+00> : vector<8xf32>
    %268 = vector.multi_reduction <add>, %267, %cst_68 [1] : vector<8x32xf32> to vector<8xf32>
    %269 = vector.shape_cast %268 : vector<8xf32> to vector<8x1xf32>
    %270 = arith.index_cast %c5_i32 : i32 to index
    %c0_69 = arith.constant 0 : index
    %271 = vector.load %arg1[%270, %c0_69] : memref<8x2xf32, #tpu.memory_space<vmem>>, vector<1x2xf32>
    %272 = vector.extract_strided_slice %271 {offsets = [0, 0], sizes = [1, 1], strides = [1, 1]} : vector<1x2xf32> to vector<1x1xf32>
    %273 = vector.extract_strided_slice %271 {offsets = [0, 1], sizes = [1, 1], strides = [1, 1]} : vector<1x2xf32> to vector<1x1xf32>
    %274 = vector.broadcast %273 : vector<1x1xf32> to vector<8x1xf32>
    %275 = arith.cmpf one, %5, %274 : vector<8x1xf32>
    %276 = vector.broadcast %272 : vector<1x1xf32> to vector<8x1xf32>
    %277 = arith.cmpf oeq, %4, %276 : vector<8x1xf32>
    %278 = arith.andi %275, %277 : vector<8x1xi1>
    %279 = arith.extui %278 : vector<8x1xi1> to vector<8x1xi32>
    %280 = arith.sitofp %279 : vector<8x1xi32> to vector<8x1xf32>
    %281 = vector.broadcast %cst_40 : f32 to vector<8x1xf32>
    %282 = arith.subf %281, %269 : vector<8x1xf32>
    %cst_70 = arith.constant 0.000000e+00 : f32
    %283 = vector.broadcast %cst_70 : f32 to vector<8x1xf32>
    %284 = arith.maximumf %283, %282 : vector<8x1xf32>
    %285 = arith.mulf %280, %284 : vector<8x1xf32>
    %286 = vector.shape_cast %285 : vector<8x1xf32> to vector<1x8x1xf32>
    %cst_71 = arith.constant dense<0.000000e+00> : vector<1xf32>
    %287 = vector.multi_reduction <add>, %286, %cst_71 [1, 2] : vector<1x8x1xf32> to vector<1xf32>
    %288 = vector.shape_cast %287 : vector<1xf32> to vector<1x1x1xf32>
    %289 = vector.extract %288[0, 0, 0] : f32 from vector<1x1x1xf32>
    %290 = arith.addf %262, %289 : f32
    %c6_i32 = arith.constant 6 : i32
    %291 = arith.index_cast %c6_i32 : i32 to index
    %c0_72 = arith.constant 0 : index
    %292 = vector.load %arg6[%291, %c0_72] : memref<8x32xf32, #tpu.memory_space<vmem>>, vector<1x32xf32>
    %293 = vector.broadcast %292 : vector<1x32xf32> to vector<8x32xf32>
    %294 = arith.subf %74, %293 : vector<8x32xf32>
    %295 = math.absf %294 : vector<8x32xf32>
    %cst_73 = arith.constant dense<0.000000e+00> : vector<8xf32>
    %296 = vector.multi_reduction <add>, %295, %cst_73 [1] : vector<8x32xf32> to vector<8xf32>
    %297 = vector.shape_cast %296 : vector<8xf32> to vector<8x1xf32>
    %298 = arith.index_cast %c6_i32 : i32 to index
    %c0_74 = arith.constant 0 : index
    %299 = vector.load %arg1[%298, %c0_74] : memref<8x2xf32, #tpu.memory_space<vmem>>, vector<1x2xf32>
    %300 = vector.extract_strided_slice %299 {offsets = [0, 0], sizes = [1, 1], strides = [1, 1]} : vector<1x2xf32> to vector<1x1xf32>
    %301 = vector.extract_strided_slice %299 {offsets = [0, 1], sizes = [1, 1], strides = [1, 1]} : vector<1x2xf32> to vector<1x1xf32>
    %302 = vector.broadcast %301 : vector<1x1xf32> to vector<8x1xf32>
    %303 = arith.cmpf one, %5, %302 : vector<8x1xf32>
    %304 = vector.broadcast %300 : vector<1x1xf32> to vector<8x1xf32>
    %305 = arith.cmpf oeq, %4, %304 : vector<8x1xf32>
    %306 = arith.andi %303, %305 : vector<8x1xi1>
    %307 = arith.extui %306 : vector<8x1xi1> to vector<8x1xi32>
    %308 = arith.sitofp %307 : vector<8x1xi32> to vector<8x1xf32>
    %309 = vector.broadcast %cst_40 : f32 to vector<8x1xf32>
    %310 = arith.subf %309, %297 : vector<8x1xf32>
    %cst_75 = arith.constant 0.000000e+00 : f32
    %311 = vector.broadcast %cst_75 : f32 to vector<8x1xf32>
    %312 = arith.maximumf %311, %310 : vector<8x1xf32>
    %313 = arith.mulf %308, %312 : vector<8x1xf32>
    %314 = vector.shape_cast %313 : vector<8x1xf32> to vector<1x8x1xf32>
    %cst_76 = arith.constant dense<0.000000e+00> : vector<1xf32>
    %315 = vector.multi_reduction <add>, %314, %cst_76 [1, 2] : vector<1x8x1xf32> to vector<1xf32>
    %316 = vector.shape_cast %315 : vector<1xf32> to vector<1x1x1xf32>
    %317 = vector.extract %316[0, 0, 0] : f32 from vector<1x1x1xf32>
    %318 = arith.addf %290, %317 : f32
    %c7_i32 = arith.constant 7 : i32
    %319 = arith.index_cast %c7_i32 : i32 to index
    %c0_77 = arith.constant 0 : index
    %320 = vector.load %arg6[%319, %c0_77] : memref<8x32xf32, #tpu.memory_space<vmem>>, vector<1x32xf32>
    %321 = vector.broadcast %320 : vector<1x32xf32> to vector<8x32xf32>
    %322 = arith.subf %74, %321 : vector<8x32xf32>
    %323 = math.absf %322 : vector<8x32xf32>
    %cst_78 = arith.constant dense<0.000000e+00> : vector<8xf32>
    %324 = vector.multi_reduction <add>, %323, %cst_78 [1] : vector<8x32xf32> to vector<8xf32>
    %325 = vector.shape_cast %324 : vector<8xf32> to vector<8x1xf32>
    %326 = arith.index_cast %c7_i32 : i32 to index
    %c0_79 = arith.constant 0 : index
    %327 = vector.load %arg1[%326, %c0_79] : memref<8x2xf32, #tpu.memory_space<vmem>>, vector<1x2xf32>
    %328 = vector.extract_strided_slice %327 {offsets = [0, 0], sizes = [1, 1], strides = [1, 1]} : vector<1x2xf32> to vector<1x1xf32>
    %329 = vector.extract_strided_slice %327 {offsets = [0, 1], sizes = [1, 1], strides = [1, 1]} : vector<1x2xf32> to vector<1x1xf32>
    %330 = vector.broadcast %329 : vector<1x1xf32> to vector<8x1xf32>
    %331 = arith.cmpf one, %5, %330 : vector<8x1xf32>
    %332 = vector.broadcast %328 : vector<1x1xf32> to vector<8x1xf32>
    %333 = arith.cmpf oeq, %4, %332 : vector<8x1xf32>
    %334 = arith.andi %331, %333 : vector<8x1xi1>
    %335 = arith.extui %334 : vector<8x1xi1> to vector<8x1xi32>
    %336 = arith.sitofp %335 : vector<8x1xi32> to vector<8x1xf32>
    %337 = vector.broadcast %cst_40 : f32 to vector<8x1xf32>
    %338 = arith.subf %337, %325 : vector<8x1xf32>
    %cst_80 = arith.constant 0.000000e+00 : f32
    %339 = vector.broadcast %cst_80 : f32 to vector<8x1xf32>
    %340 = arith.maximumf %339, %338 : vector<8x1xf32>
    %341 = arith.mulf %336, %340 : vector<8x1xf32>
    %342 = vector.shape_cast %341 : vector<8x1xf32> to vector<1x8x1xf32>
    %cst_81 = arith.constant dense<0.000000e+00> : vector<1xf32>
    %343 = vector.multi_reduction <add>, %342, %cst_81 [1, 2] : vector<1x8x1xf32> to vector<1xf32>
    %344 = vector.shape_cast %343 : vector<1xf32> to vector<1x1x1xf32>
    %345 = vector.extract %344[0, 0, 0] : f32 from vector<1x1x1xf32>
    %346 = arith.addf %318, %345 : f32
    %c8_i32 = arith.constant 8 : i32
    %cst_82 = arith.constant 5.000000e-01 : f32
    %347 = arith.mulf %cst_82, %346 : f32
    %cst_83 = arith.constant 1.000000e+00 : f32
    %348 = arith.mulf %cst_83, %347 : f32
    %cst_84 = arith.constant 1.000000e+00 : f32
    %349 = arith.maximumf %111, %cst_84 : f32
    %350 = arith.divf %348, %349 : f32
    %cst_85 = arith.constant 0.000000e+00 : f32
    %351 = arith.cmpf ogt, %111, %cst_85 : f32
    %cst_86 = arith.constant 0.000000e+00 : f32
    %352 = arith.select %351, %350, %cst_86 : f32
    %353 = arith.addf %122, %352 : f32
    %c0_87 = arith.constant 0 : index
    %c0_88 = arith.constant 0 : index
    %354 = memref.load %arg5[%c0_87, %c0_88] : memref<1x1xf32, #tpu.memory_space<smem>>
    memref.store %353, %arg5[%c0_87, %c0_88] : memref<1x1xf32, #tpu.memory_space<smem>>
    return
  }
  func.func @transform_0(%arg0: i32) -> (i32, i32) {
    %c0_i32 = arith.constant 0 : i32
    %c0_i32_0 = arith.constant 0 : i32
    %c0_i32_1 = arith.constant 0 : i32
    return %c0_i32, %c0_i32_0 : i32, i32
  }
  func.func @transform_1(%arg0: i32) -> (i32, i32) {
    %c0_i32 = arith.constant 0 : i32
    %c0_i32_0 = arith.constant 0 : i32
    %c0_i32_1 = arith.constant 0 : i32
    return %c0_i32, %c0_i32_0 : i32, i32
  }
  func.func @transform_2(%arg0: i32) -> (i32, i32) {
    %c0_i32 = arith.constant 0 : i32
    %c0_i32_0 = arith.constant 0 : i32
    %c0_i32_1 = arith.constant 0 : i32
    return %c0_i32, %c0_i32_0 : i32, i32
  }
  func.func @transform_3(%arg0: i32) -> (i32, i32) {
    %c0_i32 = arith.constant 0 : i32
    %c0_i32_0 = arith.constant 0 : i32
    %c0_i32_1 = arith.constant 0 : i32
    return %c0_i32, %c0_i32_0 : i32, i32
  }
  func.func @transform_4(%arg0: i32) -> (i32, i32) {
    %c0_i32 = arith.constant 0 : i32
    %c0_i32_0 = arith.constant 0 : i32
    %c0_i32_1 = arith.constant 0 : i32
    return %c0_i32, %c0_i32_0 : i32, i32
  }
}

</mosaic_0001>

<llo_original>
// kernel: tpu_custom_call.1
$region0: #{tpu_custom_call.1}
  #allocation0 [shape = 'u32[]', space=smem, size = 0x4, offset = 0x4, fixed_abs, tag = 'smem constant byte address 0x4 - core index']
  #allocation1 [shape = 'u32[72,128]{1,0:T(1,128)}', space=vmem, size = 0x9000, scoped, tag = 'internal scratch']
  #allocation2 [shape = 'f32[8,32]{1,0:T(8,128)}', space=vmem, size = 0x1000, scoped, tag = 'scratch operand']
  %s0 = inlined_call_operand.vmem [shape: f32[8,2], index: 0, kind: input, shape index: {}]
  %s1 = inlined_call_operand.vmem [shape: f32[2,8], index: 1, kind: input, shape index: {}]
  %s2 = inlined_call_operand.vmem [shape: f32[8,32], index: 2, kind: input, shape index: {}]
  %s3 = inlined_call_operand.vmem [shape: f32[1,32], index: 3, kind: input, shape index: {}]
  %s4 = inlined_call_operand.hbm [shape: f32[1,1], index: 4, kind: output, shape index: {}]
  %s5 = sld [smem:[#allocation0]]
  $region26: #{tpu_custom_call.1} parent=0
    _
  %s7 = ssub.s32 1, %s5
  %s8 = scalar_select 0, %s7, %s5
  $region1: #{tpu_custom_call.1} parent=0
    #allocation3 [shape = 'u8[512]{0}', space=smem, size = 0x200, scoped, tag = 'output window, operand 0, single buffered']
    #allocation4 [shape = 's32[1]{0}', space=sflag, size = 0x4, scoped, tag = 'scoped memory for tpu_custom_call.1']
    %9 = vsyncpa [#allocation4], 0
    // Predicated region
    $region2: #{tpu_custom_call.1} parent=1 // pred_check
      _
    $region3: #{tpu_custom_call.1} parent=1 // pred_check_branch
      %11 = sbr.rel (0) target = $region5
    $region4: #{tpu_custom_call.1} parent=1 // pred_region
      _
    $region5: #{tpu_custom_call.1} parent=1 // pred_fallthru
      _
    // Predicated region
    $region6: #{tpu_custom_call.1} parent=1 // pred_check
      _
    $region7: #{tpu_custom_call.1} parent=1 // pred_check_branch
      %13 = sbr.rel (0) target = $region9
    $region8: #{tpu_custom_call.1} parent=1 // pred_region
      _
    $region9: #{tpu_custom_call.1} parent=1 // pred_fallthru
      _
    // Predicated region
    $region10: #{tpu_custom_call.1} parent=1 // pred_check
      _
    $region11: #{tpu_custom_call.1} parent=1 // pred_check_branch
      %15 = sbr.rel (0) target = $region13
    $region12: #{tpu_custom_call.1} parent=1 // pred_region
      _
    $region13: #{tpu_custom_call.1} parent=1 // pred_fallthru
      _
    // Predicated region
    $region14: #{tpu_custom_call.1} parent=1 // pred_check
      _
    $region15: #{tpu_custom_call.1} parent=1 // pred_check_branch
      %17 = sbr.rel (0) target = $region17
    $region16: #{tpu_custom_call.1} parent=1 // pred_region
      _
    $region17: #{tpu_custom_call.1} parent=1 // pred_fallthru
      _
    %v19 = vld [vmem:[%s0] sm:$0xff]
    %v20 = vld [vmem:[%s1] sm:$0x3]
    %v21 = vld [vmem:[%s2] sm:$0xff]
    %v22 = vld [vmem:[%s3] sm:$0x1]
    %v23 = vmul.f32 %v21, %v21
    %vm24 = vcmask 261120
    %v25 = vsel %vm24, %v23, 0.0
    %26 = vadd.xlane.f32.xlu0 %v25
    %v27 = vpop.xlane.xlu0 %26
    %v28 = vmul.f32 %v22, %v22
    %vm29 = vcmask 253952
    %v30 = vsel %vm29, %v28, 0.0
    %31 = vadd.xlane.f32.xlu0 %v30
    %v32 = vpop.xlane.xlu0 %31
    %v33 = vrot.slane %v32, 4
    %v34 = vadd.f32 %v32, %v33
    %v35 = vrot.slane %v34, 2
    %v36 = vadd.f32 %v34, %v35
    %v37 = vrot.slane %v36, 1
    %v38 = vadd.f32 %v36, %v37
    %s39 = vtos %v38
    %v41 = vperm.slane %v22, 0
    %v43 = vmul.f32 %v21, %v41
    %v44 = vsel %vm24, %v43, 0.0
    %45 = vadd.xlane.f32.xlu0 %v44
    %v46 = vpop.xlane.xlu0 %45
    %v47 = vstv %s39
    %v48 = vmul.f32 %v47, %v27
    %v49 = vmax.f32 %v48, 1e-12
    %v50 = vrsqrt.pop %v49
    %v51 = vmul.f32 %v50, %v49
    %v52 = vmul.f32 %v51, %v50
    %v53 = vmul.f32 0.5, %v52
    %v54 = vsub.f32 1.5, %v53
    %v55 = vmul.f32 %v50, %v54
    %vm56 = vweird.f32 %v49
    %vm57 = vweird.f32 %v50
    %vm58 = vmor %vm56, %vm57
    %v59 = vsel %vm58, %v50, %v55
    %v60 = vmul.f32 %v49, %v59
    %v61 = vmul.f32 %v46, %v59
    %v62 = vmax.f32 %v61, -1.0
    %v63 = vmin.f32 %v62, 1.0
    %v64 = vmul.f32 %v63, %v63
    %v65 = vsub.f32 1.0, %v64
    %v66 = vmax.f32 %v65, 0.0
    %v67 = vrsqrt.pop %v66
    %v68 = vmul.f32 %v67, %v66
    %v69 = vmul.f32 %v68, %v67
    %v70 = vmul.f32 0.5, %v69
    %v71 = vsub.f32 1.5, %v70
    %v72 = vmul.f32 %v67, %v71
    %v73 = vmul.f32 %v66, %v72
    %vm74 = vcmp.eq.f32.partialorder %v66, inf
    %v75 = vsel %vm74, %v66, %v73
    %vm76 = vcmp.eq.f32.partialorder %v66, 0.0
    %v77 = vand.u32 %v66, 2147483648
    %v78 = vsel %vm76, %v77, %v75
    %v79 = vmul.f32 %v63, 0.87758255
    %v80 = vmul.f32 %v78, 0.47942555
    %v81 = vsub.f32 %v79, %v80
    %v82 = vadd.f32 %v79, %v80
    %v83 = vmul.f32 %v19, %v81
    %v84 = vsub.f32 1.0, %v19
    %v85 = vmul.f32 %v84, %v82
    %v86 = vadd.f32 %v83, %v85
    %v87 = vmul.f32 %v60, %v86
    %v88 = vmax.f32 %v87, 0.0
    %v89 = vmul.f32 %v87, %v19
    %v90 = vsub.f32 %v88, %v89
    %v91 = vand.u32 2147483647, %v87
    %v92 = vsub.f32 0.0, %v91
    %v93 = vmul.f32 %v92, 1.442695
    %v94 = vpow.pop %v93
    %v95 = vadd.f32 %v94, 1.0
    %v96 = vlog2.pop %v95
    %v97 = vmul.f32 %v96, 0.6931472
    %v98 = vadd.f32 %v90, %v97
    %vm99 = vcmask 7168
    %v100 = vsel %vm99, %v98, 0.0
    %101 = vadd.xlane.f32.xlu0 %v100
    %v102 = vpop.xlane.xlu0 %101
    %v103 = vrot.slane %v102, 4
    %v104 = vadd.f32 %v102, %v103
    %v105 = vrot.slane %v104, 2
    %v106 = vadd.f32 %v104, %v105
    %v107 = vrot.slane %v106, 1
    %v108 = vadd.f32 %v106, %v107
    %s109 = vtos %v108
    %v110 = vrcp.pop 8.0
    %v111 = vmul.f32 8.0, %v110
    %v112 = vsub.f32 1.0, %v111
    %v113 = vmul.f32 %v110, %v112
    %v114 = vadd.f32 %v110, %v113
    %vm115 = vweird.f32 %v110
    %v116 = vsel %vm115, %v110, %v114
    %s117 = vtos %v116
    %s118 = smul.f32 %s109, %s117
    %v119 = vmax.f32 %v27, 1e-12
    %v120 = vrsqrt.pop %v119
    %v121 = vmul.f32 %v120, %v119
    %v122 = vmul.f32 %v121, %v120
    %v123 = vmul.f32 0.5, %v122
    %v124 = vsub.f32 1.5, %v123
    %v125 = vmul.f32 %v120, %v124
    %vm126 = vweird.f32 %v119
    %vm127 = vweird.f32 %v120
    %vm128 = vmor %vm126, %vm127
    %v129 = vsel %vm128, %v120, %v125
    %v130 = vmul.f32 %v21, %v129
    %131 = vst.msk [vmem:[#allocation2] sm:$0xff] %vm24, %v130
    %v132 = vpack.c.bf16 %v130, %v130
    %v134 = vsel %vm24, %v132, 0
    %136 = vmatpush.bf16.xpose.msra.mxu0 0
    %137 = vmatpush.bf16.xpose.msra.mxu0 0
    %138 = vmatpush.bf16.xpose.msra.mxu0 0
    %139 = vmatpush.bf16.xpose.msra.mxu0 0
    %140 = vmatpush.bf16.xpose.msra.mxu0 0
    %141 = vmatpush.bf16.xpose.msra.mxu0 0
    %142 = vmatpush.bf16.xpose.msra.mxu0 0
    %143 = vmatpush.bf16.xpose.msra.mxu0 %v134
    %144 = vmatmul.bf16.gmra.mxu0 %v134
    %v145 = vpop.f32.mrf.mxu0
    %v146 = vadd.f32 0.0, %v145
    %v147 = vpop.f32.mrf.mxu0
    %148 = vdwg.mxu0
    %v149 = vmul.f32 %v146, 2.0
    %v150 = vsub.f32 2.0, %v149
    %v151 = vmax.f32 %v150, 0.0
    %v152 = vrsqrt.pop %v151
    %v153 = vmul.f32 %v152, %v151
    %v154 = vmul.f32 %v153, %v152
    %v155 = vmul.f32 0.5, %v154
    %v156 = vsub.f32 1.5, %v155
    %v157 = vmul.f32 %v152, %v156
    %v158 = vmul.f32 %v151, %v157
    %vm159 = vcmp.eq.f32.partialorder %v151, inf
    %v160 = vsel %vm159, %v151, %v158
    %vm161 = vcmp.eq.f32.partialorder %v151, 0.0
    %v162 = vand.u32 %v151, 2147483648
    %v163 = vsel %vm161, %v162, %v160
    %v164 = vlaneseq
    %v165 = vshrl.u32 %v164, 7
    %v166 = vlaneseq
    %v167 = vand.u32 %v166, 127
    %vm168 = vcmp.lt.s32.totalorder %v165, %v167
    %170 = vset.pattern.permute.xlu0 1
    %171 = vperm.xlu0 %170, %v19
    %v172 = vpop.permute.xlu0 %171
    %v174 = vperm.slane %v20, 1
    %vm175 = vcmp.eq.f32.partialorder %v172, %v174
    %176 = vset.pattern.permute.xlu0 0
    %177 = vperm.xlu0 %176, %v19
    %v178 = vpop.permute.xlu0 %177
    %v180 = vperm.slane %v20, 0
    %vm181 = vcmp.eq.f32.partialorder %v178, %v180
    %vm182 = vmand %vm168, %vm175
    %vm183 = vmxor %vm181, 1
    %vm184 = vmand %vm182, %vm183
    %v185 = vsel %vm184, 1, 0
    %v186 = vcvt.s32.f32 %v185
    %vm187 = vmxor %vm175, 1
    %vm188 = vmand %vm168, %vm187
    %vm189 = vmand %vm188, %vm181
    %v190 = vsel %vm189, 1, 0
    %v191 = vcvt.s32.f32 %v190
    %vm192 = vcmask 64512
    %v193 = vsel %vm192, %v186, 0.0
    %194 = vadd.xlane.f32.xlu0 %v193
    %v195 = vpop.xlane.xlu0 %194
    %v196 = vrot.slane %v195, 4
    %v197 = vadd.f32 %v195, %v196
    %v198 = vrot.slane %v197, 2
    %v199 = vadd.f32 %v197, %v198
    %v200 = vrot.slane %v199, 1
    %v201 = vadd.f32 %v199, %v200
    %s202 = vtos %v201
    %v203 = vsel %vm192, %v191, 0.0
    %204 = vadd.xlane.f32.xlu0 %v203
    %v205 = vpop.xlane.xlu0 %204
    %v206 = vrot.slane %v205, 4
    %v207 = vadd.f32 %v205, %v206
    %v208 = vrot.slane %v207, 2
    %v209 = vadd.f32 %v207, %v208
    %v210 = vrot.slane %v209, 1
    %v211 = vadd.f32 %v209, %v210
    %s212 = vtos %v211
    %v213 = vmul.f32 %v186, %v163
    %v214 = vsel %vm192, %v213, 0.0
    %215 = vadd.xlane.f32.xlu0 %v214
    %v216 = vpop.xlane.xlu0 %215
    %v217 = vrot.slane %v216, 4
    %v218 = vadd.f32 %v216, %v217
    %v219 = vrot.slane %v218, 2
    %v220 = vadd.f32 %v218, %v219
    %v221 = vrot.slane %v220, 1
    %v222 = vadd.f32 %v220, %v221
    %s223 = vtos %v222
    %s224 = smax.f32 %s202, 1.0
    %v225 = vstv %s224
    %v226 = vrcp.pop %v225
    %v227 = vmul.f32 %v225, %v226
    %v228 = vsub.f32 1.0, %v227
    %v229 = vmul.f32 %v226, %v228
    %v230 = vadd.f32 %v226, %v229
    %vm231 = vweird.f32 %v225
    %vm232 = vweird.f32 %v226
    %vm233 = vmor %vm231, %vm232
    %v234 = vsel %vm233, %v226, %v230
    %v235 = vand.u32 2147483647, %v225
    %vm236 = vcmp.eq.f32.partialorder %v235, 8.507059e+37
    %v237 = vand.u32 %v225, 2147483648
    %v238 = vor.u32 1.1754944e-38, %v237
    %v239 = vsel %vm236, %v238, %v234
    %s240 = vtos %v239
    %s241 = smul.f32 %s223, %s240
    %p242 = scmp.gt.f32.partialorder %s202, 0.0
    %s243 = scalar_select %p242, %s241, 0.0
    %s244 = sadd.f32 %s118, %s243
    %v245 = vld [vmem:[#allocation2] sm:$0x1]
    %v246 = vperm.slane %v245, 0
    %v247 = vsub.f32 %v130, %v246
    %v248 = vand.u32 2147483647, %v247
    %v249 = vsel %vm24, %v248, 0.0
    %250 = vadd.xlane.f32.xlu0 %v249
    %v251 = vpop.xlane.xlu0 %250
    %v252 = vld [vmem:[%s0] sm:$0x1]
    %v253 = vperm.slane %v252, 0
    %vm254 = vcmp.ne.f32.partialorder %v19, %v253
    %vm255 = vcmp.eq.f32.partialorder %v19, %v253
    %v256 = vsel %vm255, 1, 0
    %257 = vrot.lane.b32.xlu0 %v256, 1
    %v258 = vpop.permute.xlu0 %257
    %vm259 = vcmp.ne.s32.totalorder %v258, 0
    %vm260 = vmand %vm254, %vm259
    %v261 = vsel %vm260, 1, 0
    %v262 = vcvt.s32.f32 %v261
    %v263 = vsub.f32 0.5, %v251
    %v264 = vmax.f32 %v263, 0.0
    %v265 = vmul.f32 %v262, %v264
    %267 = vrot.lane.b32.xlu0 %v265, 127
    %v268 = vpop.permute.xlu0 %267
    %v270 = vsel %vm99, %v268, 0.0
    %271 = vadd.xlane.f32.xlu0 %v270
    %v272 = vpop.xlane.xlu0 %271
    %v273 = vrot.slane %v272, 4
    %v274 = vadd.f32 %v272, %v273
    %v275 = vrot.slane %v274, 2
    %v276 = vadd.f32 %v274, %v275
    %v277 = vrot.slane %v276, 1
    %v278 = vadd.f32 %v276, %v277
    %s279 = vtos %v278
    %s280 = sadd.f32 %s279, 0.0
    %v281 = vld [vmem:[#allocation2 + $0x1] sm:$0x1]
    %v282 = vperm.slane %v281, 0
    %v283 = vsub.f32 %v130, %v282
    %v284 = vand.u32 2147483647, %v283
    %v285 = vsel %vm24, %v284, 0.0
    %286 = vadd.xlane.f32.xlu0 %v285
    %v287 = vpop.xlane.xlu0 %286
    %v288 = vld [vmem:[%s0 + $0x1] sm:$0x1]
    %v289 = vperm.slane %v288, 0
    %vm290 = vcmp.ne.f32.partialorder %v19, %v289
    %vm291 = vcmp.eq.f32.partialorder %v19, %v289
    %v292 = vsel %vm291, 1, 0
    %293 = vrot.lane.b32.xlu0 %v292, 1
    %v294 = vpop.permute.xlu0 %293
    %vm295 = vcmp.ne.s32.totalorder %v294, 0
    %vm296 = vmand %vm290, %vm295
    %v297 = vsel %vm296, 1, 0
    %v298 = vcvt.s32.f32 %v297
    %v299 = vsub.f32 0.5, %v287
    %v300 = vmax.f32 %v299, 0.0
    %v301 = vmul.f32 %v298, %v300
    %303 = vrot.lane.b32.xlu0 %v301, 127
    %v304 = vpop.permute.xlu0 %303
    %v306 = vsel %vm99, %v304, 0.0
    %307 = vadd.xlane.f32.xlu0 %v306
    %v308 = vpop.xlane.xlu0 %307
    %v309 = vrot.slane %v308, 4
    %v310 = vadd.f32 %v308, %v309
    %v311 = vrot.slane %v310, 2
    %v312 = vadd.f32 %v310, %v311
    %v313 = vrot.slane %v312, 1
    %v314 = vadd.f32 %v312, %v313
    %s315 = vtos %v314
    %s316 = sadd.f32 %s280, %s315
    %v317 = vld [vmem:[#allocation2 + $0x2] sm:$0x1]
    %v318 = vperm.slane %v317, 0
    %v319 = vsub.f32 %v130, %v318
    %v320 = vand.u32 2147483647, %v319
    %v321 = vsel %vm24, %v320, 0.0
    %322 = vadd.xlane.f32.xlu0 %v321
    %v323 = vpop.xlane.xlu0 %322
    %v324 = vld [vmem:[%s0 + $0x2] sm:$0x1]
    %v325 = vperm.slane %v324, 0
    %vm326 = vcmp.ne.f32.partialorder %v19, %v325
    %vm327 = vcmp.eq.f32.partialorder %v19, %v325
    %v328 = vsel %vm327, 1, 0
    %329 = vrot.lane.b32.xlu0 %v328, 1
    %v330 = vpop.permute.xlu0 %329
    %vm331 = vcmp.ne.s32.totalorder %v330, 0
    %vm332 = vmand %vm326, %vm331
    %v333 = vsel %vm332, 1, 0
    %v334 = vcvt.s32.f32 %v333
    %v335 = vsub.f32 0.5, %v323
    %v336 = vmax.f32 %v335, 0.0
    %v337 = vmul.f32 %v334, %v336
    %339 = vrot.lane.b32.xlu0 %v337, 127
    %v340 = vpop.permute.xlu0 %339
    %v342 = vsel %vm99, %v340, 0.0
    %343 = vadd.xlane.f32.xlu0 %v342
    %v344 = vpop.xlane.xlu0 %343
    %v345 = vrot.slane %v344, 4
    %v346 = vadd.f32 %v344, %v345
    %v347 = vrot.slane %v346, 2
    %v348 = vadd.f32 %v346, %v347
    %v349 = vrot.slane %v348, 1
    %v350 = vadd.f32 %v348, %v349
    %s351 = vtos %v350
    %s352 = sadd.f32 %s316, %s351
    %v353 = vld [vmem:[#allocation2 + $0x3] sm:$0x1]
    %v354 = vperm.slane %v353, 0
    %v355 = vsub.f32 %v130, %v354
    %v356 = vand.u32 2147483647, %v355
    %v357 = vsel %vm24, %v356, 0.0
    %358 = vadd.xlane.f32.xlu0 %v357
    %v359 = vpop.xlane.xlu0 %358
    %v360 = vld [vmem:[%s0 + $0x3] sm:$0x1]
    %v361 = vperm.slane %v360, 0
    %vm362 = vcmp.ne.f32.partialorder %v19, %v361
    %vm363 = vcmp.eq.f32.partialorder %v19, %v361
    %v364 = vsel %vm363, 1, 0
    %365 = vrot.lane.b32.xlu0 %v364, 1
    %v366 = vpop.permute.xlu0 %365
    %vm367 = vcmp.ne.s32.totalorder %v366, 0
    %vm368 = vmand %vm362, %vm367
    %v369 = vsel %vm368, 1, 0
    %v370 = vcvt.s32.f32 %v369
    %v371 = vsub.f32 0.5, %v359
    %v372 = vmax.f32 %v371, 0.0
    %v373 = vmul.f32 %v370, %v372
    %375 = vrot.lane.b32.xlu0 %v373, 127
    %v376 = vpop.permute.xlu0 %375
    %v378 = vsel %vm99, %v376, 0.0
    %379 = vadd.xlane.f32.xlu0 %v378
    %v380 = vpop.xlane.xlu0 %379
    %v381 = vrot.slane %v380, 4
    %v382 = vadd.f32 %v380, %v381
    %v383 = vrot.slane %v382, 2
    %v384 = vadd.f32 %v382, %v383
    %v385 = vrot.slane %v384, 1
    %v386 = vadd.f32 %v384, %v385
    %s387 = vtos %v386
    %s388 = sadd.f32 %s352, %s387
    %v389 = vld [vmem:[#allocation2 + $0x4] sm:$0x1]
    %v390 = vperm.slane %v389, 0
    %v391 = vsub.f32 %v130, %v390
    %v392 = vand.u32 2147483647, %v391
    %v393 = vsel %vm24, %v392, 0.0
    %394 = vadd.xlane.f32.xlu0 %v393
    %v395 = vpop.xlane.xlu0 %394
    %v396 = vld [vmem:[%s0 + $0x4] sm:$0x1]
    %v397 = vperm.slane %v396, 0
    %vm398 = vcmp.ne.f32.partialorder %v19, %v397
    %vm399 = vcmp.eq.f32.partialorder %v19, %v397
    %v400 = vsel %vm399, 1, 0
    %401 = vrot.lane.b32.xlu0 %v400, 1
    %v402 = vpop.permute.xlu0 %401
    %vm403 = vcmp.ne.s32.totalorder %v402, 0
    %vm404 = vmand %vm398, %vm403
    %v405 = vsel %vm404, 1, 0
    %v406 = vcvt.s32.f32 %v405
    %v407 = vsub.f32 0.5, %v395
    %v408 = vmax.f32 %v407, 0.0
    %v409 = vmul.f32 %v406, %v408
    %411 = vrot.lane.b32.xlu0 %v409, 127
    %v412 = vpop.permute.xlu0 %411
    %v414 = vsel %vm99, %v412, 0.0
    %415 = vadd.xlane.f32.xlu0 %v414
    %v416 = vpop.xlane.xlu0 %415
    %v417 = vrot.slane %v416, 4
    %v418 = vadd.f32 %v416, %v417
    %v419 = vrot.slane %v418, 2
    %v420 = vadd.f32 %v418, %v419
    %v421 = vrot.slane %v420, 1
    %v422 = vadd.f32 %v420, %v421
    %s423 = vtos %v422
    %s424 = sadd.f32 %s388, %s423
    %v425 = vld [vmem:[#allocation2 + $0x5] sm:$0x1]
    %v426 = vperm.slane %v425, 0
    %v427 = vsub.f32 %v130, %v426
    %v428 = vand.u32 2147483647, %v427
    %v429 = vsel %vm24, %v428, 0.0
    %430 = vadd.xlane.f32.xlu0 %v429
    %v431 = vpop.xlane.xlu0 %430
    %v432 = vld [vmem:[%s0 + $0x5] sm:$0x1]
    %v433 = vperm.slane %v432, 0
    %vm434 = vcmp.ne.f32.partialorder %v19, %v433
    %vm435 = vcmp.eq.f32.partialorder %v19, %v433
    %v436 = vsel %vm435, 1, 0
    %437 = vrot.lane.b32.xlu0 %v436, 1
    %v438 = vpop.permute.xlu0 %437
    %vm439 = vcmp.ne.s32.totalorder %v438, 0
    %vm440 = vmand %vm434, %vm439
    %v441 = vsel %vm440, 1, 0
    %v442 = vcvt.s32.f32 %v441
    %v443 = vsub.f32 0.5, %v431
    %v444 = vmax.f32 %v443, 0.0
    %v445 = vmul.f32 %v442, %v444
    %447 = vrot.lane.b32.xlu0 %v445, 127
    %v448 = vpop.permute.xlu0 %447
    %v450 = vsel %vm99, %v448, 0.0
    %451 = vadd.xlane.f32.xlu0 %v450
    %v452 = vpop.xlane.xlu0 %451
    %v453 = vrot.slane %v452, 4
    %v454 = vadd.f32 %v452, %v453
    %v455 = vrot.slane %v454, 2
    %v456 = vadd.f32 %v454, %v455
    %v457 = vrot.slane %v456, 1
    %v458 = vadd.f32 %v456, %v457
    %s459 = vtos %v458
    %s460 = sadd.f32 %s424, %s459
    %v461 = vld [vmem:[#allocation2 + $0x6] sm:$0x1]
    %v462 = vperm.slane %v461, 0
    %v463 = vsub.f32 %v130, %v462
    %v464 = vand.u32 2147483647, %v463
    %v465 = vsel %vm24, %v464, 0.0
    %466 = vadd.xlane.f32.xlu0 %v465
    %v467 = vpop.xlane.xlu0 %466
    %v468 = vld [vmem:[%s0 + $0x6] sm:$0x1]
    %v469 = vperm.slane %v468, 0
    %vm470 = vcmp.ne.f32.partialorder %v19, %v469
    %vm471 = vcmp.eq.f32.partialorder %v19, %v469
    %v472 = vsel %vm471, 1, 0
    %473 = vrot.lane.b32.xlu0 %v472, 1
    %v474 = vpop.permute.xlu0 %473
    %vm475 = vcmp.ne.s32.totalorder %v474, 0
    %vm476 = vmand %vm470, %vm475
    %v477 = vsel %vm476, 1, 0
    %v478 = vcvt.s32.f32 %v477
    %v479 = vsub.f32 0.5, %v467
    %v480 = vmax.f32 %v479, 0.0
    %v481 = vmul.f32 %v478, %v480
    %483 = vrot.lane.b32.xlu0 %v481, 127
    %v484 = vpop.permute.xlu0 %483
    %v486 = vsel %vm99, %v484, 0.0
    %487 = vadd.xlane.f32.xlu0 %v486
    %v488 = vpop.xlane.xlu0 %487
    %v489 = vrot.slane %v488, 4
    %v490 = vadd.f32 %v488, %v489
    %v491 = vrot.slane %v490, 2
    %v492 = vadd.f32 %v490, %v491
    %v493 = vrot.slane %v492, 1
    %v494 = vadd.f32 %v492, %v493
    %s495 = vtos %v494
    %s496 = sadd.f32 %s460, %s495
    %v497 = vld [vmem:[#allocation2 + $0x7] sm:$0x1]
    %v498 = vperm.slane %v497, 0
    %v499 = vsub.f32 %v130, %v498
    %v500 = vand.u32 2147483647, %v499
    %v501 = vsel %vm24, %v500, 0.0
    %502 = vadd.xlane.f32.xlu0 %v501
    %v503 = vpop.xlane.xlu0 %502
    %v504 = vld [vmem:[%s0 + $0x7] sm:$0x1]
    %v505 = vperm.slane %v504, 0
    %vm506 = vcmp.ne.f32.partialorder %v19, %v505
    %vm507 = vcmp.eq.f32.partialorder %v19, %v505
    %v508 = vsel %vm507, 1, 0
    %509 = vrot.lane.b32.xlu0 %v508, 1
    %v510 = vpop.permute.xlu0 %509
    %vm511 = vcmp.ne.s32.totalorder %v510, 0
    %vm512 = vmand %vm506, %vm511
    %v513 = vsel %vm512, 1, 0
    %v514 = vcvt.s32.f32 %v513
    %v515 = vsub.f32 0.5, %v503
    %v516 = vmax.f32 %v515, 0.0
    %v517 = vmul.f32 %v514, %v516
    %519 = vrot.lane.b32.xlu0 %v517, 127
    %v520 = vpop.permute.xlu0 %519
    %v522 = vsel %vm99, %v520, 0.0
    %523 = vadd.xlane.f32.xlu0 %v522
    %v524 = vpop.xlane.xlu0 %523
    %v525 = vrot.slane %v524, 4
    %v526 = vadd.f32 %v524, %v525
    %v527 = vrot.slane %v526, 2
    %v528 = vadd.f32 %v526, %v527
    %v529 = vrot.slane %v528, 1
    %v530 = vadd.f32 %v528, %v529
    %s531 = vtos %v530
    %s532 = sadd.f32 %s496, %s531
    %s533 = smul.f32 %s532, 0.5
    %s534 = smax.f32 %s212, 1.0
    %v535 = vstv %s534
    %v536 = vrcp.pop %v535
    %v537 = vmul.f32 %v535, %v536
    %v538 = vsub.f32 1.0, %v537
    %v539 = vmul.f32 %v536, %v538
    %v540 = vadd.f32 %v536, %v539
    %vm541 = vweird.f32 %v535
    %vm542 = vweird.f32 %v536
    %vm543 = vmor %vm541, %vm542
    %v544 = vsel %vm543, %v536, %v540
    %v545 = vand.u32 2147483647, %v535
    %vm546 = vcmp.eq.f32.partialorder %v545, 8.507059e+37
    %v547 = vand.u32 %v535, 2147483648
    %v548 = vor.u32 1.1754944e-38, %v547
    %v549 = vsel %vm546, %v548, %v544
    %s550 = vtos %v549
    %s551 = smul.f32 %s533, %s550
    %p552 = scmp.gt.f32.partialorder %s212, 0.0
    %s553 = scalar_select %p552, %s551, 0.0
    %s554 = sadd.f32 %s244, %s553
    %s555 = scalar_lea.smem [#allocation3], 0
    %556 = sst [smem:[%s555]] %s554
    // Predicated region
    $region18: #{tpu_custom_call.1} parent=1 // pred_check
      _
    $region19: #{tpu_custom_call.1} parent=1 // pred_check_branch
      %558 = sbr.rel (0) target = $region21
    $region20: #{tpu_custom_call.1} parent=1 // pred_region
      %560 = vsyncadd [#allocation4], 0
      %s562 = sshll.u32 %s4, 4
      %s563 = int_to_ptr.hbm [resolvable:$true] %s562
      %565 = dma.smem_to_hbm [#allocation3], 16, %s563, [#allocation4]
    $region21: #{tpu_custom_call.1} parent=1 // pred_fallthru
      _
    // Predicated region
    $region22: #{tpu_custom_call.1} parent=1 // pred_check
      _
    $region23: #{tpu_custom_call.1} parent=1 // pred_check_branch
      %567 = sbr.rel (0) target = $region25
    $region24: #{tpu_custom_call.1} parent=1 // pred_region
      %569 = dma.done [#allocation4], 16
    $region25: #{tpu_custom_call.1} parent=1 // pred_fallthru
      _
    %570 = sfence
    %571 = vsyncpa [#allocation4], 1

</llo_original>
